<compile_context>
chip_gen: v5e
topology: v5e:2x2
jax: 0.10.0
libtpu: 0.0.40
codegen_flags: <defaults>
</compile_context>

<pallas_src>
import jax
import jax.numpy as jnp
from jax.experimental import pallas as pl
from jax.experimental.pallas import tpu as pltpu


def deps2deps_kernel(emb_ref, tags_ref,
                     wt_ref, bt_ref,
                     wae_ref, wat_ref, ba_ref, v_ref,
                     whe_ref, wht_ref, bh_ref,
                     wo_ref, bo_ref,
                     out_ref):
    tb, S, E = emb_ref.shape

    emb = emb_ref[...]                                    # (tb, S, E) f32
    tags = tags_ref[...]                                  # (tb, S, T) f32

    # Flatten (tb, S) into the M dim so the MXU sees one big matmul per layer
    # instead of tb tiny ones (S is a multiple of 8 -> layout-preserving reshape).
    emb2 = emb.reshape(tb * S, E)                         # (tb*S, E)
    tags2 = tags.reshape(tb * S, -1)                      # (tb*S, T)

    # --- tags MLP: Linear + ReLU (Dropout is identity in eval mode) ---
    tag2 = jnp.dot(tags2.astype(wt_ref.dtype), wt_ref[...],
                   preferred_element_type=jnp.float32) + bt_ref[...]
    tag2 = jnp.maximum(tag2, 0.0)                         # (tb*S, To) f32

    # --- attention energy: tanh(emb@Wa_e + tag@Wa_t + ba); concat removed ---
    energy2 = jnp.tanh(
        jnp.dot(emb2.astype(wae_ref.dtype), wae_ref[...],
                preferred_element_type=jnp.float32)
        + jnp.dot(tag2.astype(wat_ref.dtype), wat_ref[...],
                  preferred_element_type=jnp.float32)
        + ba_ref[...])                                    # (tb*S, H) f32

    # --- score = sum(v * energy, -1), softmax over the sequence dim ---
    energy = energy2.reshape(tb, S, -1)                   # (tb, S, H)
    score = jnp.sum(v_ref[...] * energy, axis=-1)         # (tb, S)
    score = score - jnp.max(score, axis=1, keepdims=True)
    es = jnp.exp(score)
    denom = jnp.sum(es, axis=1, keepdims=True)
    attn = es * pl.reciprocal(denom, approx=True)         # (tb, S)  (EUP recip)

    # --- attn.bmm(dep_pre) without the concat: two weighted sums ---
    a3 = attn[:, :, None]                                 # (tb, S, 1)
    x_emb = jnp.sum(a3 * emb, axis=1)                     # (tb, E)
    x_tag = jnp.sum(a3 * tag2.reshape(tb, S, -1), axis=1) # (tb, To)

    # --- hidden_seq: Linear + ReLU (Dropout identity) ---
    h = jnp.maximum(
        jnp.dot(x_emb.astype(whe_ref.dtype), whe_ref[...],
                preferred_element_type=jnp.float32)
        + jnp.dot(x_tag.astype(wht_ref.dtype), wht_ref[...],
                  preferred_element_type=jnp.float32)
        + bh_ref[...], 0.0)                               # (tb, Hd) f32

    # --- out_layer (vocab padded to a lane-dense multiple of 128) ---
    out_ref[...] = (jnp.dot(h.astype(wo_ref.dtype), wo_ref[...],
                            preferred_element_type=jnp.float32)
                    + bo_ref[...])                        # (tb, Vp)


def deps2deps_forward(dep_ids, tags, params, *, block_b=8):
    """Embedding gather in JAX, everything else in one gridded Pallas kernel."""
    B, S = dep_ids.shape
    T = tags.shape[-1]
    E = params['embed'].shape[1]
    To = params['wt'].shape[1]
    H = params['wa_e'].shape[1]
    Hd = params['wh_e'].shape[1]
    V = params['wo'].shape[1]
    Vp = pl.cdiv(V, 128) * 128                            # lane-dense output tile

    # TODO(synk): embedding gather stays as jnp.take in HBM; an in-kernel gather
    # would need PrefetchScalarGridSpec + pl.Element row indexing over B*S rows.
    emb = jnp.take(params['embed'], dep_ids, axis=0)      # (B, S, E) f32

    wo_p = jnp.pad(params['wo'], ((0, 0), (0, Vp - V)))   # zero-padded vocab cols
    bo_p = jnp.pad(params['bo'], ((0, 0), (0, Vp - V)))

    tb = min(block_b, B)
    assert B % tb == 0, "batch must be divisible by the batch tile"

    kernel_inputs = (
        emb, tags,
        params['wt'], params['bt'],
        params['wa_e'], params['wa_t'], params['ba'], params['v'],
        params['wh_e'], params['wh_t'], params['bh'],
        wo_p, bo_p,
    )

    const2 = lambda b: (0, 0)                             # weights: VMEM-resident
    in_specs = [
        pl.BlockSpec((tb, S, E), lambda b: (b, 0, 0)),    # emb   (pipelined per batch tile)
        pl.BlockSpec((tb, S, T), lambda b: (b, 0, 0)),    # tags
        pl.BlockSpec((T, To), const2),                    # wt
        pl.BlockSpec((1, To), const2),                    # bt
        pl.BlockSpec((E, H), const2),                     # wa_e
        pl.BlockSpec((To, H), const2),                    # wa_t
        pl.BlockSpec((1, H), const2),                     # ba
        pl.BlockSpec((1, H), const2),                     # v
        pl.BlockSpec((E, Hd), const2),                    # wh_e
        pl.BlockSpec((To, Hd), const2),                   # wh_t
        pl.BlockSpec((1, Hd), const2),                    # bh
        pl.BlockSpec((Hd, Vp), const2),                   # wo (padded)
        pl.BlockSpec((1, Vp), const2),                    # bo (padded)
    ]

    flops = (2 * B * S * (T * To + E * H + To * H + H)
             + 2 * B * (E * Hd + To * Hd + Hd * Vp))
    transcendentals = B * S * (H + 1)
    bytes_accessed = (sum(int(x.size) * x.dtype.itemsize for x in kernel_inputs)
                      + B * Vp * 4)

    out_padded = pl.pallas_call(
        deps2deps_kernel,
        out_shape=jax.ShapeDtypeStruct((B, Vp), jnp.float32),
        grid=(B // tb,),
        in_specs=in_specs,
        out_specs=pl.BlockSpec((tb, Vp), lambda b: (b, 0)),
        compiler_params=pltpu.CompilerParams(
            dimension_semantics=("parallel",),            # megacore on v7x
            vmem_limit_bytes=32 * 1024 * 1024),           # explicit (v5e default is 16 MiB)
        cost_estimate=pl.CostEstimate(flops=flops,
                                      transcendentals=transcendentals,
                                      bytes_accessed=bytes_accessed),
    )(*kernel_inputs)

    return out_padded[:, :V]


def deps2deps_reference(dep_ids, tags, params):
    """Pure-JAX reference (same bf16-stored weights, f32 math)."""
    f32 = jnp.float32
    emb = jnp.take(params['embed'], dep_ids, axis=0)
    tag_out = jax.nn.relu(tags @ params['wt'].astype(f32) + params['bt'])
    energy = jnp.tanh(emb @ params['wa_e'].astype(f32)
                      + tag_out @ params['wa_t'].astype(f32) + params['ba'])
    score = jnp.sum(params['v'] * energy, axis=-1)
    attn = jax.nn.softmax(score, axis=1)
    x_emb = jnp.einsum('bs,bse->be', attn, emb)
    x_tag = jnp.einsum('bs,bst->bt', attn, tag_out)
    h = jax.nn.relu(x_emb @ params['wh_e'].astype(f32)
                    + x_tag @ params['wh_t'].astype(f32) + params['bh'])
    return h @ params['wo'].astype(f32) + params['bo']


def init_params(key, *, vocab_size, embed_size, tag_vocab_size, tag_out_size,
                attn_hidden_size, hidden_size, padding_idx,
                weight_dtype=jnp.bfloat16):
    ks = jax.random.split(key, 10)
    pre_out = embed_size + tag_out_size

    def lin(kw, kb, fan_in, fan_out):
        bound = fan_in ** -0.5
        w = jax.random.uniform(kw, (fan_in, fan_out), jnp.float32, -bound, bound)
        b = jax.random.uniform(kb, (1, fan_out), jnp.float32, -bound, bound)
        return w, b

    embed = jax.random.normal(ks[0], (vocab_size, embed_size), jnp.float32)
    embed = embed.at[padding_idx].set(0.0)                # padding_idx row is zero

    wt, bt = lin(ks[1], ks[2], tag_vocab_size, tag_out_size)
    wa, ba = lin(ks[3], ks[4], pre_out, attn_hidden_size)
    v_bound = attn_hidden_size ** -0.5
    v = jax.random.uniform(ks[5], (1, attn_hidden_size), jnp.float32, -v_bound, v_bound)
    wh, bh = lin(ks[6], ks[7], pre_out, hidden_size)
    wo, bo = lin(ks[8], ks[9], hidden_size, vocab_size)

    wd = weight_dtype
    return dict(
        embed=embed,
        wt=wt.astype(wd), bt=bt,
        # Wa / Wh split into emb-half and tag-half (replaces the concat):
        wa_e=wa[:embed_size].astype(wd), wa_t=wa[embed_size:].astype(wd),
        ba=ba, v=v,
        wh_e=wh[:embed_size].astype(wd), wh_t=wh[embed_size:].astype(wd),
        bh=bh,
        wo=wo.astype(wd), bo=bo,
    )


if __name__ == "__main__":
    # Small deterministic config (use_tags=True, Dropout in eval mode).
    B, S = 16, 8                          # batch tile = 8 -> grid=(2,), "parallel"
    VOCAB, EMBED = 32, 16
    TAG_VOCAB, TAG_OUT = 8, 16            # tags_linear_sizes = [16]
    ATTN_HIDDEN = 32
    HIDDEN = 32                           # hidden_linear_sizes = [32]
    PAD_IDX = 0
    # TODO(synk): Dropout layers are treated as identity (inference mode).

    key = jax.random.PRNGKey(0)
    k_par, k_ids, k_tags = jax.random.split(key, 3)

    params = init_params(k_par,
                         vocab_size=VOCAB, embed_size=EMBED,
                         tag_vocab_size=TAG_VOCAB, tag_out_size=TAG_OUT,
                         attn_hidden_size=ATTN_HIDDEN, hidden_size=HIDDEN,
                         padding_idx=PAD_IDX)

    dep_ids = jax.random.randint(k_ids, (B, S), 0, VOCAB, dtype=jnp.int32)
    tags = jax.random.normal(k_tags, (B, S, TAG_VOCAB), jnp.float32)

    out = deps2deps_forward(dep_ids, tags, params)
    jax.block_until_ready(out)

    ref = deps2deps_reference(dep_ids, tags, params)
    assert out.shape == (B, VOCAB), out.shape
    assert bool(jnp.all(jnp.isfinite(out)))
    max_err = float(jnp.max(jnp.abs(out - ref)))
    assert bool(jnp.allclose(out, ref, atol=5e-2, rtol=5e-2)), max_err
    print("KERNEL_OK")
</pallas_src>

<mosaic_0001>
module attributes {stable_mosaic.version = 11 : i64} {
  func.func @deps2deps_kernel(%arg0: i32, %arg1: memref<8x8x16xf32, #tpu.memory_space<vmem>>, %arg2: memref<8x8x8xf32, #tpu.memory_space<vmem>>, %arg3: memref<8x16xbf16, #tpu.memory_space<vmem>>, %arg4: memref<1x16xf32, #tpu.memory_space<vmem>>, %arg5: memref<16x32xbf16, #tpu.memory_space<vmem>>, %arg6: memref<16x32xbf16, #tpu.memory_space<vmem>>, %arg7: memref<1x32xf32, #tpu.memory_space<vmem>>, %arg8: memref<1x32xf32, #tpu.memory_space<vmem>>, %arg9: memref<16x32xbf16, #tpu.memory_space<vmem>>, %arg10: memref<16x32xbf16, #tpu.memory_space<vmem>>, %arg11: memref<1x32xf32, #tpu.memory_space<vmem>>, %arg12: memref<32x128xbf16, #tpu.memory_space<vmem>>, %arg13: memref<1x128xf32, #tpu.memory_space<vmem>>, %arg14: memref<8x128xf32, #tpu.memory_space<vmem>>) attributes {dimension_semantics = [#tpu.dimension_semantics<parallel>], iteration_bounds = array<i64: 2>, scalar_prefetch = 0 : i64, scratch_operands = 0 : i64, tpu.core_type = #tpu.core_type<tc>, window_params = [{transform_indices = @transform_0, window_bounds = array<i64: 8, 8, 16>}, {transform_indices = @transform_1, window_bounds = array<i64: 8, 8, 8>}, {pipeline_mode = #tpu.pipeline_mode<synchronous>, transform_indices = @transform_2, window_bounds = array<i64: 8, 16>}, {pipeline_mode = #tpu.pipeline_mode<synchronous>, transform_indices = @transform_3, window_bounds = array<i64: 1, 16>}, {pipeline_mode = #tpu.pipeline_mode<synchronous>, transform_indices = @transform_4, window_bounds = array<i64: 16, 32>}, {pipeline_mode = #tpu.pipeline_mode<synchronous>, transform_indices = @transform_5, window_bounds = array<i64: 16, 32>}, {pipeline_mode = #tpu.pipeline_mode<synchronous>, transform_indices = @transform_6, window_bounds = array<i64: 1, 32>}, {pipeline_mode = #tpu.pipeline_mode<synchronous>, transform_indices = @transform_7, window_bounds = array<i64: 1, 32>}, {pipeline_mode = #tpu.pipeline_mode<synchronous>, transform_indices = @transform_8, window_bounds = array<i64: 16, 32>}, {pipeline_mode = #tpu.pipeline_mode<synchronous>, transform_indices = @transform_9, window_bounds = array<i64: 16, 32>}, {pipeline_mode = #tpu.pipeline_mode<synchronous>, transform_indices = @transform_10, window_bounds = array<i64: 1, 32>}, {pipeline_mode = #tpu.pipeline_mode<synchronous>, transform_indices = @transform_11, window_bounds = array<i64: 32, 128>}, {pipeline_mode = #tpu.pipeline_mode<synchronous>, transform_indices = @transform_12, window_bounds = array<i64: 1, 128>}, {transform_indices = @transform_13, window_bounds = array<i64: 8, 128>}]} {
    %c0 = arith.constant 0 : index
    %c0_0 = arith.constant 0 : index
    %c0_1 = arith.constant 0 : index
    %0 = vector.load %arg1[%c0, %c0_0, %c0_1] : memref<8x8x16xf32, #tpu.memory_space<vmem>>, vector<8x8x16xf32>
    %c0_2 = arith.constant 0 : index
    %c0_3 = arith.constant 0 : index
    %c0_4 = arith.constant 0 : index
    %1 = vector.load %arg2[%c0_2, %c0_3, %c0_4] : memref<8x8x8xf32, #tpu.memory_space<vmem>>, vector<8x8x8xf32>
    %2 = vector.shape_cast %0 : vector<8x8x16xf32> to vector<64x16xf32>
    %3 = vector.shape_cast %1 : vector<8x8x8xf32> to vector<64x8xf32>
    %4 = arith.truncf %3 : vector<64x8xf32> to vector<64x8xbf16>
    %c0_5 = arith.constant 0 : index
    %c0_6 = arith.constant 0 : index
    %5 = vector.load %arg3[%c0_5, %c0_6] : memref<8x16xbf16, #tpu.memory_space<vmem>>, vector<8x16xbf16>
    %cst = arith.constant dense<0.000000e+00> : vector<64x16xf32>
    %6 = tpu.matmul %4, %5, %cst {dimension_numbers = #tpu.dot_dimension_numbers<[1], [0], [0], [1], [0, 0, 1, 1], [], []>} : vector<64x8xbf16>, vector<8x16xbf16>, vector<64x16xf32> -> vector<64x16xf32>
    %c0_7 = arith.constant 0 : index
    %c0_8 = arith.constant 0 : index
    %7 = vector.load %arg4[%c0_7, %c0_8] : memref<1x16xf32, #tpu.memory_space<vmem>>, vector<1x16xf32>
    %8 = vector.broadcast %7 : vector<1x16xf32> to vector<64x16xf32>
    %9 = arith.addf %6, %8 : vector<64x16xf32>
    %cst_9 = arith.constant 0.000000e+00 : f32
    %10 = vector.broadcast %cst_9 : f32 to vector<64x16xf32>
    %11 = arith.maximumf %9, %10 : vector<64x16xf32>
    %12 = arith.truncf %2 : vector<64x16xf32> to vector<64x16xbf16>
    %c0_10 = arith.constant 0 : index
    %c0_11 = arith.constant 0 : index
    %13 = vector.load %arg5[%c0_10, %c0_11] : memref<16x32xbf16, #tpu.memory_space<vmem>>, vector<16x32xbf16>
    %cst_12 = arith.constant dense<0.000000e+00> : vector<64x32xf32>
    %14 = tpu.matmul %12, %13, %cst_12 {dimension_numbers = #tpu.dot_dimension_numbers<[1], [0], [0], [1], [0, 0, 1, 1], [], []>} : vector<64x16xbf16>, vector<16x32xbf16>, vector<64x32xf32> -> vector<64x32xf32>
    %15 = arith.truncf %11 : vector<64x16xf32> to vector<64x16xbf16>
    %c0_13 = arith.constant 0 : index
    %c0_14 = arith.constant 0 : index
    %16 = vector.load %arg6[%c0_13, %c0_14] : memref<16x32xbf16, #tpu.memory_space<vmem>>, vector<16x32xbf16>
    %cst_15 = arith.constant dense<0.000000e+00> : vector<64x32xf32>
    %17 = tpu.matmul %15, %16, %cst_15 {dimension_numbers = #tpu.dot_dimension_numbers<[1], [0], [0], [1], [0, 0, 1, 1], [], []>} : vector<64x16xbf16>, vector<16x32xbf16>, vector<64x32xf32> -> vector<64x32xf32>
    %18 = arith.addf %14, %17 : vector<64x32xf32>
    %c0_16 = arith.constant 0 : index
    %c0_17 = arith.constant 0 : index
    %19 = vector.load %arg7[%c0_16, %c0_17] : memref<1x32xf32, #tpu.memory_space<vmem>>, vector<1x32xf32>
    %20 = vector.broadcast %19 : vector<1x32xf32> to vector<64x32xf32>
    %21 = arith.addf %18, %20 : vector<64x32xf32>
    %22 = math.tanh %21 : vector<64x32xf32>
    %23 = vector.shape_cast %22 : vector<64x32xf32> to vector<8x8x32xf32>
    %c0_18 = arith.constant 0 : index
    %c0_19 = arith.constant 0 : index
    %24 = vector.load %arg8[%c0_18, %c0_19] : memref<1x32xf32, #tpu.memory_space<vmem>>, vector<1x32xf32>
    %25 = vector.shape_cast %24 : vector<1x32xf32> to vector<1x1x32xf32>
    %26 = vector.broadcast %25 : vector<1x1x32xf32> to vector<8x8x32xf32>
    %27 = arith.mulf %26, %23 : vector<8x8x32xf32>
    %cst_20 = arith.constant dense<0.000000e+00> : vector<8x8xf32>
    %28 = vector.multi_reduction <add>, %27, %cst_20 [2] : vector<8x8x32xf32> to vector<8x8xf32>
    %cst_21 = arith.constant dense<0xFF800000> : vector<8xf32>
    %29 = vector.multi_reduction <maximumf>, %28, %cst_21 [1] : vector<8x8xf32> to vector<8xf32>
    %30 = vector.shape_cast %29 : vector<8xf32> to vector<8x1xf32>
    %31 = vector.broadcast %30 : vector<8x1xf32> to vector<8x8xf32>
    %32 = arith.subf %28, %31 : vector<8x8xf32>
    %33 = math.exp %32 : vector<8x8xf32>
    %cst_22 = arith.constant dense<0.000000e+00> : vector<8xf32>
    %34 = vector.multi_reduction <add>, %33, %cst_22 [1] : vector<8x8xf32> to vector<8xf32>
    %35 = vector.shape_cast %34 : vector<8xf32> to vector<8x1xf32>
    %36 = tpu.reciprocal %35 {approx = true} : vector<8x1xf32> -> vector<8x1xf32>
    %37 = vector.broadcast %36 : vector<8x1xf32> to vector<8x8xf32>
    %38 = arith.mulf %33, %37 : vector<8x8xf32>
    %39 = vector.shape_cast %38 : vector<8x8xf32> to vector<8x8x1xf32>
    %40 = vector.broadcast %39 : vector<8x8x1xf32> to vector<8x8x16xf32>
    %41 = arith.mulf %40, %0 : vector<8x8x16xf32>
    %cst_23 = arith.constant dense<0.000000e+00> : vector<8x16xf32>
    %42 = vector.multi_reduction <add>, %41, %cst_23 [1] : vector<8x8x16xf32> to vector<8x16xf32>
    %43 = vector.shape_cast %11 : vector<64x16xf32> to vector<8x8x16xf32>
    %44 = vector.broadcast %39 : vector<8x8x1xf32> to vector<8x8x16xf32>
    %45 = arith.mulf %44, %43 : vector<8x8x16xf32>
    %cst_24 = arith.constant dense<0.000000e+00> : vector<8x16xf32>
    %46 = vector.multi_reduction <add>, %45, %cst_24 [1] : vector<8x8x16xf32> to vector<8x16xf32>
    %47 = arith.truncf %42 : vector<8x16xf32> to vector<8x16xbf16>
    %c0_25 = arith.constant 0 : index
    %c0_26 = arith.constant 0 : index
    %48 = vector.load %arg9[%c0_25, %c0_26] : memref<16x32xbf16, #tpu.memory_space<vmem>>, vector<16x32xbf16>
    %cst_27 = arith.constant dense<0.000000e+00> : vector<8x32xf32>
    %49 = tpu.matmul %47, %48, %cst_27 {dimension_numbers = #tpu.dot_dimension_numbers<[1], [0], [0], [1], [0, 0, 1, 1], [], []>} : vector<8x16xbf16>, vector<16x32xbf16>, vector<8x32xf32> -> vector<8x32xf32>
    %50 = arith.truncf %46 : vector<8x16xf32> to vector<8x16xbf16>
    %c0_28 = arith.constant 0 : index
    %c0_29 = arith.constant 0 : index
    %51 = vector.load %arg10[%c0_28, %c0_29] : memref<16x32xbf16, #tpu.memory_space<vmem>>, vector<16x32xbf16>
    %cst_30 = arith.constant dense<0.000000e+00> : vector<8x32xf32>
    %52 = tpu.matmul %50, %51, %cst_30 {dimension_numbers = #tpu.dot_dimension_numbers<[1], [0], [0], [1], [0, 0, 1, 1], [], []>} : vector<8x16xbf16>, vector<16x32xbf16>, vector<8x32xf32> -> vector<8x32xf32>
    %53 = arith.addf %49, %52 : vector<8x32xf32>
    %c0_31 = arith.constant 0 : index
    %c0_32 = arith.constant 0 : index
    %54 = vector.load %arg11[%c0_31, %c0_32] : memref<1x32xf32, #tpu.memory_space<vmem>>, vector<1x32xf32>
    %55 = vector.broadcast %54 : vector<1x32xf32> to vector<8x32xf32>
    %56 = arith.addf %53, %55 : vector<8x32xf32>
    %cst_33 = arith.constant 0.000000e+00 : f32
    %57 = vector.broadcast %cst_33 : f32 to vector<8x32xf32>
    %58 = arith.maximumf %56, %57 : vector<8x32xf32>
    %59 = arith.truncf %58 : vector<8x32xf32> to vector<8x32xbf16>
    %c0_34 = arith.constant 0 : index
    %c0_35 = arith.constant 0 : index
    %60 = vector.load %arg12[%c0_34, %c0_35] : memref<32x128xbf16, #tpu.memory_space<vmem>>, vector<32x128xbf16>
    %cst_36 = arith.constant dense<0.000000e+00> : vector<8x128xf32>
    %61 = tpu.matmul %59, %60, %cst_36 {dimension_numbers = #tpu.dot_dimension_numbers<[1], [0], [0], [1], [0, 0, 1, 1], [], []>} : vector<8x32xbf16>, vector<32x128xbf16>, vector<8x128xf32> -> vector<8x128xf32>
    %c0_37 = arith.constant 0 : index
    %c0_38 = arith.constant 0 : index
    %62 = vector.load %arg13[%c0_37, %c0_38] : memref<1x128xf32, #tpu.memory_space<vmem>>, vector<1x128xf32>
    %63 = vector.broadcast %62 : vector<1x128xf32> to vector<8x128xf32>
    %64 = arith.addf %61, %63 : vector<8x128xf32>
    %c0_39 = arith.constant 0 : index
    %c0_40 = arith.constant 0 : index
    %65 = vector.load %arg14[%c0_39, %c0_40] : memref<8x128xf32, #tpu.memory_space<vmem>>, vector<8x128xf32>
    tpu.vector_store %arg14[%c0_39, %c0_40], %64 {strides = array<i32>} : memref<8x128xf32, #tpu.memory_space<vmem>>, vector<8x128xf32>,
    return
  }
  func.func @transform_0(%arg0: i32) -> (i32, i32, i32) {
    %c0_i32 = arith.constant 0 : i32
    %c0_i32_0 = arith.constant 0 : i32
    %c0_i32_1 = arith.constant 0 : i32
    return %arg0, %c0_i32, %c0_i32_0 : i32, i32, i32
  }
  func.func @transform_1(%arg0: i32) -> (i32, i32, i32) {
    %c0_i32 = arith.constant 0 : i32
    %c0_i32_0 = arith.constant 0 : i32
    %c0_i32_1 = arith.constant 0 : i32
    return %arg0, %c0_i32, %c0_i32_0 : i32, i32, i32
  }
  func.func @transform_2(%arg0: i32) -> (i32, i32) {
    %c0_i32 = arith.constant 0 : i32
    %c0_i32_0 = arith.constant 0 : i32
    %c0_i32_1 = arith.constant 0 : i32
    return %c0_i32, %c0_i32_0 : i32, i32
  }
  func.func @transform_3(%arg0: i32) -> (i32, i32) {
    %c0_i32 = arith.constant 0 : i32
    %c0_i32_0 = arith.constant 0 : i32
    %c0_i32_1 = arith.constant 0 : i32
    return %c0_i32, %c0_i32_0 : i32, i32
  }
  func.func @transform_4(%arg0: i32) -> (i32, i32) {
    %c0_i32 = arith.constant 0 : i32
    %c0_i32_0 = arith.constant 0 : i32
    %c0_i32_1 = arith.constant 0 : i32
    return %c0_i32, %c0_i32_0 : i32, i32
  }
  func.func @transform_5(%arg0: i32) -> (i32, i32) {
    %c0_i32 = arith.constant 0 : i32
    %c0_i32_0 = arith.constant 0 : i32
    %c0_i32_1 = arith.constant 0 : i32
    return %c0_i32, %c0_i32_0 : i32, i32
  }
  func.func @transform_6(%arg0: i32) -> (i32, i32) {
    %c0_i32 = arith.constant 0 : i32
    %c0_i32_0 = arith.constant 0 : i32
    %c0_i32_1 = arith.constant 0 : i32
    return %c0_i32, %c0_i32_0 : i32, i32
  }
  func.func @transform_7(%arg0: i32) -> (i32, i32) {
    %c0_i32 = arith.constant 0 : i32
    %c0_i32_0 = arith.constant 0 : i32
    %c0_i32_1 = arith.constant 0 : i32
    return %c0_i32, %c0_i32_0 : i32, i32
  }
  func.func @transform_8(%arg0: i32) -> (i32, i32) {
    %c0_i32 = arith.constant 0 : i32
    %c0_i32_0 = arith.constant 0 : i32
    %c0_i32_1 = arith.constant 0 : i32
    return %c0_i32, %c0_i32_0 : i32, i32
  }
  func.func @transform_9(%arg0: i32) -> (i32, i32) {
    %c0_i32 = arith.constant 0 : i32
    %c0_i32_0 = arith.constant 0 : i32
    %c0_i32_1 = arith.constant 0 : i32
    return %c0_i32, %c0_i32_0 : i32, i32
  }
  func.func @transform_10(%arg0: i32) -> (i32, i32) {
    %c0_i32 = arith.constant 0 : i32
    %c0_i32_0 = arith.constant 0 : i32
    %c0_i32_1 = arith.constant 0 : i32
    return %c0_i32, %c0_i32_0 : i32, i32
  }
  func.func @transform_11(%arg0: i32) -> (i32, i32) {
    %c0_i32 = arith.constant 0 : i32
    %c0_i32_0 = arith.constant 0 : i32
    %c0_i32_1 = arith.constant 0 : i32
    return %c0_i32, %c0_i32_0 : i32, i32
  }
  func.func @transform_12(%arg0: i32) -> (i32, i32) {
    %c0_i32 = arith.constant 0 : i32
    %c0_i32_0 = arith.constant 0 : i32
    %c0_i32_1 = arith.constant 0 : i32
    return %c0_i32, %c0_i32_0 : i32, i32
  }
  func.func @transform_13(%arg0: i32) -> (i32, i32) {
    %c0_i32 = arith.constant 0 : i32
    %c0_i32_0 = arith.constant 0 : i32
    return %arg0, %c0_i32 : i32, i32
  }
}

</mosaic_0001>

<llo_original>
// kernel: tpu_custom_call.1
$region0: #{tpu_custom_call.1}
  #allocation0 [shape = 'u32[]', space=smem, size = 0x4, offset = 0x4, fixed_abs, tag = 'smem constant byte address 0x4 - core index']
  #allocation1 [shape = 'u32[72,128]{1,0:T(1,128)}', space=vmem, size = 0x9000, scoped, tag = 'internal scratch']
  %s0 = inlined_call_operand.vmem [shape: f32[16,8,16], index: 0, kind: input, shape index: {}]
  %s1 = inlined_call_operand.vmem [shape: f32[16,8,8], index: 1, kind: input, shape index: {}]
  %s2 = inlined_call_operand.vmem [shape: bf16[8,16], index: 2, kind: input, shape index: {}]
  %s3 = inlined_call_operand.vmem [shape: f32[1,16], index: 3, kind: input, shape index: {}]
  %s4 = inlined_call_operand.vmem [shape: bf16[16,32], index: 4, kind: input, shape index: {}]
  %s5 = inlined_call_operand.vmem [shape: bf16[16,32], index: 5, kind: input, shape index: {}]
  %s6 = inlined_call_operand.vmem [shape: f32[1,32], index: 6, kind: input, shape index: {}]
  %s7 = inlined_call_operand.vmem [shape: f32[1,32], index: 7, kind: input, shape index: {}]
  %s8 = inlined_call_operand.vmem [shape: bf16[16,32], index: 8, kind: input, shape index: {}]
  %s9 = inlined_call_operand.vmem [shape: bf16[16,32], index: 9, kind: input, shape index: {}]
  %s10 = inlined_call_operand.vmem [shape: f32[1,32], index: 10, kind: input, shape index: {}]
  %s11 = inlined_call_operand.vmem [shape: bf16[32,128], index: 11, kind: input, shape index: {}]
  %s12 = inlined_call_operand.vmem [shape: f32[1,128], index: 12, kind: input, shape index: {}]
  %s13 = inlined_call_operand.hbm [shape: f32[16,128], index: 13, kind: output, shape index: {}]
  %s14 = sld [smem:[#allocation0]]
  $region85: #{tpu_custom_call.1} parent=0
    _
  %s16 = ssub.s32 1, %s14
  %s17 = scalar_select 0, %s16, %s14
  $region1: #{tpu_custom_call.1} parent=0
    #allocation2 [shape = 'u8[8192]{0}', space=vmem, size = 0x2000, scoped, tag = 'output window, operand 0']
    #allocation3 [shape = 's32[2]{0}', space=sflag, size = 0x8, scoped, tag = 'scoped memory for tpu_custom_call.1']
    %18 = vsyncpa [#allocation3], 0
    %s19 = scalar_lea.sflag [#allocation3], 1
    %20 = vsyncpa %s19, 0
    loop: start=0, step=1, limit=4
    $region2: #{tpu_custom_call.1} parent=1 // loop_pre_header
      _
    $region3: #{tpu_custom_call.1} parent=1 // loop_header
      %s22 = sphi 0, %s26
      %p23 = scmp.ge.s32.totalorder %s22, 4
      %s32 = sphi 0, %s34
      %s35 = sphi 0, %s32
      %s36 = sphi 0, %s35
      %s52 = sphi 0, %s36
      %s58 = sphi 0, %s60
      %s61 = sphi 0, %s58
      %s62 = sphi 0, %s61
      %s78 = sphi 0, %s62
      %s82 = sphi 0, %s82
      %s84 = sphi 0, %s82
      %s85 = sphi 0, %s84
      %s99 = sphi 0, %s85
      %s103 = sphi 0, %s103
      %s105 = sphi 0, %s103
      %s106 = sphi 0, %s105
      %s120 = sphi 0, %s106
      %s124 = sphi 0, %s124
      %s126 = sphi 0, %s124
      %s127 = sphi 0, %s126
      %s141 = sphi 0, %s127
      %s145 = sphi 0, %s145
      %s147 = sphi 0, %s145
      %s148 = sphi 0, %s147
      %s162 = sphi 0, %s148
      %s166 = sphi 0, %s166
      %s168 = sphi 0, %s166
      %s169 = sphi 0, %s168
      %s183 = sphi 0, %s169
      %s187 = sphi 0, %s187
      %s189 = sphi 0, %s187
      %s190 = sphi 0, %s189
      %s204 = sphi 0, %s190
      %s208 = sphi 0, %s208
      %s210 = sphi 0, %s208
      %s211 = sphi 0, %s210
      %s225 = sphi 0, %s211
      %s229 = sphi 0, %s229
      %s231 = sphi 0, %s229
      %s232 = sphi 0, %s231
      %s246 = sphi 0, %s232
      %s250 = sphi 0, %s250
      %s252 = sphi 0, %s250
      %s253 = sphi 0, %s252
      %s267 = sphi 0, %s253
      %s271 = sphi 0, %s271
      %s273 = sphi 0, %s271
      %s274 = sphi 0, %s273
      %s288 = sphi 0, %s274
      %s292 = sphi 0, %s292
      %s294 = sphi 0, %s292
      %s295 = sphi 0, %s294
      %s309 = sphi 0, %s295
      %s315 = sphi 0, %s317
      %s318 = sphi 0, %s315
      %s319 = sphi 0, %s318
      %s335 = sphi 0, %s319
    $region4: #{tpu_custom_call.1} parent=1 // loop_header_branch
      %25 = sbr.rel (%p23) target = $region8
    $region5: #{tpu_custom_call.1} parent=1 // loop_body
      %s27 = ssub.s32 %s22, 1
      %s28 = ssub.s32 %s22, 2
      %s29 = sadd.s32 %s22, 1
      %s30 = ssub.s32 %s22, %s29
      %p31 = scmp.eq.s32.totalorder %s30, 0
      %s33 = sadd.s32 %s32, 1
      %s34 = scalar_select %p31, %s32, %s33
      %p37 = pneg %p31
      %p38 = scmp.eq.s32.totalorder %s22, 1
      %p39 = por %p37, %p38
      %p40 = scmp.ne.s32.totalorder %s32, %s35
      %p41 = scmp.eq.s32.totalorder %s22, 0
      %p42 = por %p40, %p41
      %p43 = scmp.ne.s32.totalorder %s32, %s35
      %p44 = scmp.eq.s32.totalorder %s27, 1
      %p45 = por %p43, %p44
      %p46 = scmp.ne.s32.totalorder %s35, %s36
      %p47 = scmp.eq.s32.totalorder %s27, 0
      %p48 = por %p46, %p47
      %p49 = scmp.ne.s32.totalorder %s35, %s36
      %p50 = scmp.eq.s32.totalorder %s28, 1
      %p51 = por %p49, %p50
      %p53 = scmp.ne.s32.totalorder %s36, %s52
      %p54 = scmp.eq.s32.totalorder %s28, 0
      %p55 = por %p53, %p54
      %s56 = ssub.s32 %s22, %s29
      %p57 = scmp.eq.s32.totalorder %s56, 0
      %s59 = sadd.s32 %s58, 1
      %s60 = scalar_select %p57, %s58, %s59
      %p63 = pneg %p57
      %p64 = scmp.eq.s32.totalorder %s22, 1
      %p65 = por %p63, %p64
      %p66 = scmp.ne.s32.totalorder %s58, %s61
      %p67 = scmp.eq.s32.totalorder %s22, 0
      %p68 = por %p66, %p67
      %p69 = scmp.ne.s32.totalorder %s58, %s61
      %p70 = scmp.eq.s32.totalorder %s27, 1
      %p71 = por %p69, %p70
      %p72 = scmp.ne.s32.totalorder %s61, %s62
      %p73 = scmp.eq.s32.totalorder %s27, 0
      %p74 = por %p72, %p73
      %p75 = scmp.ne.s32.totalorder %s61, %s62
      %p76 = scmp.eq.s32.totalorder %s28, 1
      %p77 = por %p75, %p76
      %p79 = scmp.ne.s32.totalorder %s62, %s78
      %p80 = scmp.eq.s32.totalorder %s28, 0
      %p81 = por %p79, %p80
      %s83 = sadd.s32 %s82, 1
      %p86 = scmp.eq.s32.totalorder %s22, 1
      %p87 = scmp.ne.s32.totalorder %s82, %s84
      %p88 = scmp.eq.s32.totalorder %s22, 0
      %p89 = por %p87, %p88
      %p90 = scmp.ne.s32.totalorder %s82, %s84
      %p91 = scmp.eq.s32.totalorder %s27, 1
      %p92 = por %p90, %p91
      %p93 = scmp.ne.s32.totalorder %s84, %s85
      %p94 = scmp.eq.s32.totalorder %s27, 0
      %p95 = por %p93, %p94
      %p96 = scmp.ne.s32.totalorder %s84, %s85
      %p97 = scmp.eq.s32.totalorder %s28, 1
      %p98 = por %p96, %p97
      %p100 = scmp.ne.s32.totalorder %s85, %s99
      %p101 = scmp.eq.s32.totalorder %s28, 0
      %p102 = por %p100, %p101
      %s104 = sadd.s32 %s103, 1
      %p107 = scmp.eq.s32.totalorder %s22, 1
      %p108 = scmp.ne.s32.totalorder %s103, %s105
      %p109 = scmp.eq.s32.totalorder %s22, 0
      %p110 = por %p108, %p109
      %p111 = scmp.ne.s32.totalorder %s103, %s105
      %p112 = scmp.eq.s32.totalorder %s27, 1
      %p113 = por %p111, %p112
      %p114 = scmp.ne.s32.totalorder %s105, %s106
      %p115 = scmp.eq.s32.totalorder %s27, 0
      %p116 = por %p114, %p115
      %p117 = scmp.ne.s32.totalorder %s105, %s106
      %p118 = scmp.eq.s32.totalorder %s28, 1
      %p119 = por %p117, %p118
      %p121 = scmp.ne.s32.totalorder %s106, %s120
      %p122 = scmp.eq.s32.totalorder %s28, 0
      %p123 = por %p121, %p122
      %s125 = sadd.s32 %s124, 1
      %p128 = scmp.eq.s32.totalorder %s22, 1
      %p129 = scmp.ne.s32.totalorder %s124, %s126
      %p130 = scmp.eq.s32.totalorder %s22, 0
      %p131 = por %p129, %p130
      %p132 = scmp.ne.s32.totalorder %s124, %s126
      %p133 = scmp.eq.s32.totalorder %s27, 1
      %p134 = por %p132, %p133
      %p135 = scmp.ne.s32.totalorder %s126, %s127
      %p136 = scmp.eq.s32.totalorder %s27, 0
      %p137 = por %p135, %p136
      %p138 = scmp.ne.s32.totalorder %s126, %s127
      %p139 = scmp.eq.s32.totalorder %s28, 1
      %p140 = por %p138, %p139
      %p142 = scmp.ne.s32.totalorder %s127, %s141
      %p143 = scmp.eq.s32.totalorder %s28, 0
      %p144 = por %p142, %p143
      %s146 = sadd.s32 %s145, 1
      %p149 = scmp.eq.s32.totalorder %s22, 1
      %p150 = scmp.ne.s32.totalorder %s145, %s147
      %p151 = scmp.eq.s32.totalorder %s22, 0
      %p152 = por %p150, %p151
      %p153 = scmp.ne.s32.totalorder %s145, %s147
      %p154 = scmp.eq.s32.totalorder %s27, 1
      %p155 = por %p153, %p154
      %p156 = scmp.ne.s32.totalorder %s147, %s148
      %p157 = scmp.eq.s32.totalorder %s27, 0
      %p158 = por %p156, %p157
      %p159 = scmp.ne.s32.totalorder %s147, %s148
      %p160 = scmp.eq.s32.totalorder %s28, 1
      %p161 = por %p159, %p160
      %p163 = scmp.ne.s32.totalorder %s148, %s162
      %p164 = scmp.eq.s32.totalorder %s28, 0
      %p165 = por %p163, %p164
      %s167 = sadd.s32 %s166, 1
      %p170 = scmp.eq.s32.totalorder %s22, 1
      %p171 = scmp.ne.s32.totalorder %s166, %s168
      %p172 = scmp.eq.s32.totalorder %s22, 0
      %p173 = por %p171, %p172
      %p174 = scmp.ne.s32.totalorder %s166, %s168
      %p175 = scmp.eq.s32.totalorder %s27, 1
      %p176 = por %p174, %p175
      %p177 = scmp.ne.s32.totalorder %s168, %s169
      %p178 = scmp.eq.s32.totalorder %s27, 0
      %p179 = por %p177, %p178
      %p180 = scmp.ne.s32.totalorder %s168, %s169
      %p181 = scmp.eq.s32.totalorder %s28, 1
      %p182 = por %p180, %p181
      %p184 = scmp.ne.s32.totalorder %s169, %s183
      %p185 = scmp.eq.s32.totalorder %s28, 0
      %p186 = por %p184, %p185
      %s188 = sadd.s32 %s187, 1
      %p191 = scmp.eq.s32.totalorder %s22, 1
      %p192 = scmp.ne.s32.totalorder %s187, %s189
      %p193 = scmp.eq.s32.totalorder %s22, 0
      %p194 = por %p192, %p193
      %p195 = scmp.ne.s32.totalorder %s187, %s189
      %p196 = scmp.eq.s32.totalorder %s27, 1
      %p197 = por %p195, %p196
      %p198 = scmp.ne.s32.totalorder %s189, %s190
      %p199 = scmp.eq.s32.totalorder %s27, 0
      %p200 = por %p198, %p199
      %p201 = scmp.ne.s32.totalorder %s189, %s190
      %p202 = scmp.eq.s32.totalorder %s28, 1
      %p203 = por %p201, %p202
      %p205 = scmp.ne.s32.totalorder %s190, %s204
      %p206 = scmp.eq.s32.totalorder %s28, 0
      %p207 = por %p205, %p206
      %s209 = sadd.s32 %s208, 1
      %p212 = scmp.eq.s32.totalorder %s22, 1
      %p213 = scmp.ne.s32.totalorder %s208, %s210
      %p214 = scmp.eq.s32.totalorder %s22, 0
      %p215 = por %p213, %p214
      %p216 = scmp.ne.s32.totalorder %s208, %s210
      %p217 = scmp.eq.s32.totalorder %s27, 1
      %p218 = por %p216, %p217
      %p219 = scmp.ne.s32.totalorder %s210, %s211
      %p220 = scmp.eq.s32.totalorder %s27, 0
      %p221 = por %p219, %p220
      %p222 = scmp.ne.s32.totalorder %s210, %s211
      %p223 = scmp.eq.s32.totalorder %s28, 1
      %p224 = por %p222, %p223
      %p226 = scmp.ne.s32.totalorder %s211, %s225
      %p227 = scmp.eq.s32.totalorder %s28, 0
      %p228 = por %p226, %p227
      %s230 = sadd.s32 %s229, 1
      %p233 = scmp.eq.s32.totalorder %s22, 1
      %p234 = scmp.ne.s32.totalorder %s229, %s231
      %p235 = scmp.eq.s32.totalorder %s22, 0
      %p236 = por %p234, %p235
      %p237 = scmp.ne.s32.totalorder %s229, %s231
      %p238 = scmp.eq.s32.totalorder %s27, 1
      %p239 = por %p237, %p238
      %p240 = scmp.ne.s32.totalorder %s231, %s232
      %p241 = scmp.eq.s32.totalorder %s27, 0
      %p242 = por %p240, %p241
      %p243 = scmp.ne.s32.totalorder %s231, %s232
      %p244 = scmp.eq.s32.totalorder %s28, 1
      %p245 = por %p243, %p244
      %p247 = scmp.ne.s32.totalorder %s232, %s246
      %p248 = scmp.eq.s32.totalorder %s28, 0
      %p249 = por %p247, %p248
      %s251 = sadd.s32 %s250, 1
      %p254 = scmp.eq.s32.totalorder %s22, 1
      %p255 = scmp.ne.s32.totalorder %s250, %s252
      %p256 = scmp.eq.s32.totalorder %s22, 0
      %p257 = por %p255, %p256
      %p258 = scmp.ne.s32.totalorder %s250, %s252
      %p259 = scmp.eq.s32.totalorder %s27, 1
      %p260 = por %p258, %p259
      %p261 = scmp.ne.s32.totalorder %s252, %s253
      %p262 = scmp.eq.s32.totalorder %s27, 0
      %p263 = por %p261, %p262
      %p264 = scmp.ne.s32.totalorder %s252, %s253
      %p265 = scmp.eq.s32.totalorder %s28, 1
      %p266 = por %p264, %p265
      %p268 = scmp.ne.s32.totalorder %s253, %s267
      %p269 = scmp.eq.s32.totalorder %s28, 0
      %p270 = por %p268, %p269
      %s272 = sadd.s32 %s271, 1
      %p275 = scmp.eq.s32.totalorder %s22, 1
      %p276 = scmp.ne.s32.totalorder %s271, %s273
      %p277 = scmp.eq.s32.totalorder %s22, 0
      %p278 = por %p276, %p277
      %p279 = scmp.ne.s32.totalorder %s271, %s273
      %p280 = scmp.eq.s32.totalorder %s27, 1
      %p281 = por %p279, %p280
      %p282 = scmp.ne.s32.totalorder %s273, %s274
      %p283 = scmp.eq.s32.totalorder %s27, 0
      %p284 = por %p282, %p283
      %p285 = scmp.ne.s32.totalorder %s273, %s274
      %p286 = scmp.eq.s32.totalorder %s28, 1
      %p287 = por %p285, %p286
      %p289 = scmp.ne.s32.totalorder %s274, %s288
      %p290 = scmp.eq.s32.totalorder %s28, 0
      %p291 = por %p289, %p290
      %s293 = sadd.s32 %s292, 1
      %p296 = scmp.eq.s32.totalorder %s22, 1
      %p297 = scmp.ne.s32.totalorder %s292, %s294
      %p298 = scmp.eq.s32.totalorder %s22, 0
      %p299 = por %p297, %p298
      %p300 = scmp.ne.s32.totalorder %s292, %s294
      %p301 = scmp.eq.s32.totalorder %s27, 1
      %p302 = por %p300, %p301
      %p303 = scmp.ne.s32.totalorder %s294, %s295
      %p304 = scmp.eq.s32.totalorder %s27, 0
      %p305 = por %p303, %p304
      %p306 = scmp.ne.s32.totalorder %s294, %s295
      %p307 = scmp.eq.s32.totalorder %s28, 1
      %p308 = por %p306, %p307
      %p310 = scmp.ne.s32.totalorder %s295, %s309
      %p311 = scmp.eq.s32.totalorder %s28, 0
      %p312 = por %p310, %p311
      %s313 = ssub.s32 %s22, %s29
      %p314 = scmp.eq.s32.totalorder %s313, 0
      %s316 = sadd.s32 %s315, 1
      %s317 = scalar_select %p314, %s315, %s316
      %p320 = pneg %p314
      %p321 = scmp.eq.s32.totalorder %s22, 1
      %p322 = por %p320, %p321
      %p323 = scmp.ne.s32.totalorder %s315, %s318
      %p324 = scmp.eq.s32.totalorder %s22, 0
      %p325 = por %p323, %p324
      %p326 = scmp.ne.s32.totalorder %s315, %s318
      %p327 = scmp.eq.s32.totalorder %s27, 1
      %p328 = por %p326, %p327
      %p329 = scmp.ne.s32.totalorder %s318, %s319
      %p330 = scmp.eq.s32.totalorder %s27, 0
      %p331 = por %p329, %p330
      %p332 = scmp.ne.s32.totalorder %s318, %s319
      %p333 = scmp.eq.s32.totalorder %s28, 1
      %p334 = por %p332, %p333
      %p336 = scmp.ne.s32.totalorder %s319, %s335
      %p337 = scmp.eq.s32.totalorder %s28, 0
      %p338 = por %p336, %p337
      %p339 = scmp.le.s32.totalorder 1, %s22
      %p340 = scmp.lt.s32.totalorder %s22, 3
      %p341 = pnand %p339, %p340
      %p342 = pneg %p341
      // Predicated region
      $region9: #{tpu_custom_call.1} parent=5 // pred_check
        _
      $region10: #{tpu_custom_call.1} parent=5 // pred_check_branch
        %344 = sbr.rel (%p341) target = $region12
      $region11: #{tpu_custom_call.1} parent=5 // pred_region
        %s345 = ssub.s32 %s22, 1
        // Predicated region
        $region13: #{tpu_custom_call.1} parent=11 // pred_check
          %p346 = pneg %p95
        $region14: #{tpu_custom_call.1} parent=11 // pred_check_branch
          %348 = sbr.rel (%p346) target = $region16
        $region15: #{tpu_custom_call.1} parent=11 // pred_region
          _
        $region16: #{tpu_custom_call.1} parent=11 // pred_fallthru
          _
        // Predicated region
        $region17: #{tpu_custom_call.1} parent=11 // pred_check
          %p349 = pneg %p116
        $region18: #{tpu_custom_call.1} parent=11 // pred_check_branch
          %351 = sbr.rel (%p349) target = $region20
        $region19: #{tpu_custom_call.1} parent=11 // pred_region
          _
        $region20: #{tpu_custom_call.1} parent=11 // pred_fallthru
          _
        // Predicated region
        $region21: #{tpu_custom_call.1} parent=11 // pred_check
          %p352 = pneg %p137
        $region22: #{tpu_custom_call.1} parent=11 // pred_check_branch
          %354 = sbr.rel (%p352) target = $region24
        $region23: #{tpu_custom_call.1} parent=11 // pred_region
          _
        $region24: #{tpu_custom_call.1} parent=11 // pred_fallthru
          _
        // Predicated region
        $region25: #{tpu_custom_call.1} parent=11 // pred_check
          %p355 = pneg %p158
        $region26: #{tpu_custom_call.1} parent=11 // pred_check_branch
          %357 = sbr.rel (%p355) target = $region28
        $region27: #{tpu_custom_call.1} parent=11 // pred_region
          _
        $region28: #{tpu_custom_call.1} parent=11 // pred_fallthru
          _
        // Predicated region
        $region29: #{tpu_custom_call.1} parent=11 // pred_check
          %p358 = pneg %p179
        $region30: #{tpu_custom_call.1} parent=11 // pred_check_branch
          %360 = sbr.rel (%p358) target = $region32
        $region31: #{tpu_custom_call.1} parent=11 // pred_region
          _
        $region32: #{tpu_custom_call.1} parent=11 // pred_fallthru
          _
        // Predicated region
        $region33: #{tpu_custom_call.1} parent=11 // pred_check
          %p361 = pneg %p200
        $region34: #{tpu_custom_call.1} parent=11 // pred_check_branch
          %363 = sbr.rel (%p361) target = $region36
        $region35: #{tpu_custom_call.1} parent=11 // pred_region
          _
        $region36: #{tpu_custom_call.1} parent=11 // pred_fallthru
          _
        // Predicated region
        $region37: #{tpu_custom_call.1} parent=11 // pred_check
          %p364 = pneg %p221
        $region38: #{tpu_custom_call.1} parent=11 // pred_check_branch
          %366 = sbr.rel (%p364) target = $region40
        $region39: #{tpu_custom_call.1} parent=11 // pred_region
          _
        $region40: #{tpu_custom_call.1} parent=11 // pred_fallthru
          _
        // Predicated region
        $region41: #{tpu_custom_call.1} parent=11 // pred_check
          %p367 = pneg %p242
        $region42: #{tpu_custom_call.1} parent=11 // pred_check_branch
          %369 = sbr.rel (%p367) target = $region44
        $region43: #{tpu_custom_call.1} parent=11 // pred_region
          _
        $region44: #{tpu_custom_call.1} parent=11 // pred_fallthru
          _
        // Predicated region
        $region45: #{tpu_custom_call.1} parent=11 // pred_check
          %p370 = pneg %p263
        $region46: #{tpu_custom_call.1} parent=11 // pred_check_branch
          %372 = sbr.rel (%p370) target = $region48
        $region47: #{tpu_custom_call.1} parent=11 // pred_region
          _
        $region48: #{tpu_custom_call.1} parent=11 // pred_fallthru
          _
        // Predicated region
        $region49: #{tpu_custom_call.1} parent=11 // pred_check
          %p373 = pneg %p284
        $region50: #{tpu_custom_call.1} parent=11 // pred_check_branch
          %375 = sbr.rel (%p373) target = $region52
        $region51: #{tpu_custom_call.1} parent=11 // pred_region
          _
        $region52: #{tpu_custom_call.1} parent=11 // pred_fallthru
          _
        // Predicated region
        $region53: #{tpu_custom_call.1} parent=11 // pred_check
          %p376 = pneg %p305
        $region54: #{tpu_custom_call.1} parent=11 // pred_check_branch
          %378 = sbr.rel (%p376) target = $region56
        $region55: #{tpu_custom_call.1} parent=11 // pred_region
          _
        $region56: #{tpu_custom_call.1} parent=11 // pred_fallthru
          _
      $region12: #{tpu_custom_call.1} parent=5 // pred_fallthru
        _
      %p379 = scmp.lt.s32.totalorder %s22, 2
      // Predicated region
      $region57: #{tpu_custom_call.1} parent=5 // pred_check
        %p380 = pneg %p379
      $region58: #{tpu_custom_call.1} parent=5 // pred_check_branch
        %382 = sbr.rel (%p380) target = $region60
      $region59: #{tpu_custom_call.1} parent=5 // pred_region
        // Predicated region
        $region61: #{tpu_custom_call.1} parent=59 // pred_check
          %p383 = pneg %p42
        $region62: #{tpu_custom_call.1} parent=59 // pred_check_branch
          %385 = sbr.rel (%p383) target = $region64
        $region63: #{tpu_custom_call.1} parent=59 // pred_region
          %s386 = smul.u32 8, %s22
          %p387 = scmp.lt.s32.totalorder %s386, 15
          %s388 = scalar_select %p387, %s386, 15
          %s389 = smul.addr %s388, 8
          %s390 = scalar_lea.vmem %s0, %s389
          %s391 = smul.u32 8, %s22
        $region64: #{tpu_custom_call.1} parent=59 // pred_fallthru
          _
        // Predicated region
        $region65: #{tpu_custom_call.1} parent=59 // pred_check
          %p392 = pneg %p68
        $region66: #{tpu_custom_call.1} parent=59 // pred_check_branch
          %394 = sbr.rel (%p392) target = $region68
        $region67: #{tpu_custom_call.1} parent=59 // pred_region
          %s395 = smul.u32 8, %s22
          %p396 = scmp.lt.s32.totalorder %s395, 15
          %s397 = scalar_select %p396, %s395, 15
          %s398 = smul.addr %s397, 8
          %s399 = scalar_lea.vmem %s1, %s398
          %s400 = smul.u32 8, %s22
        $region68: #{tpu_custom_call.1} parent=59 // pred_fallthru
          _
      $region60: #{tpu_custom_call.1} parent=5 // pred_fallthru
        _
      %p401 = scmp.le.s32.totalorder 1, %s22
      %p402 = scmp.lt.s32.totalorder %s22, 3
      %p403 = pnand %p401, %p402
      %p404 = pneg %p403
      // Predicated region
      $region69: #{tpu_custom_call.1} parent=5 // pred_check
        _
      $region70: #{tpu_custom_call.1} parent=5 // pred_check_branch
        %406 = sbr.rel (%p403) target = $region72
      $region71: #{tpu_custom_call.1} parent=5 // pred_region
        %s407 = ssub.s32 %s22, 1
        %s408 = smul.u32 8, %s27
        %p409 = scmp.lt.s32.totalorder %s408, 15
        %s410 = scalar_select %p409, %s408, 15
        %s411 = smul.addr %s410, 8
        %s412 = scalar_lea.vmem %s0, %s411
        %p413 = pneg %p48
        %p414 = pneg %p45
        %s415 = smul.u32 8, %s27
        %p416 = scmp.lt.s32.totalorder %s415, 15
        %s417 = scalar_select %p416, %s415, 15
        %s418 = smul.addr %s417, 8
        %s419 = scalar_lea.vmem %s1, %s418
        %p420 = pneg %p74
        %p421 = pneg %p71
        %p422 = pneg %p95
        %p423 = pneg %p92
        %p424 = pneg %p116
        %p425 = pneg %p113
        %p426 = pneg %p137
        %p427 = pneg %p134
        %p428 = pneg %p158
        %p429 = pneg %p155
        %p430 = pneg %p179
        %p431 = pneg %p176
        %p432 = pneg %p200
        %p433 = pneg %p197
        %p434 = pneg %p221
        %p435 = pneg %p218
        %p436 = pneg %p242
        %p437 = pneg %p239
        %p438 = pneg %p263
        %p439 = pneg %p260
        %p440 = pneg %p284
        %p441 = pneg %p281
        %p442 = pneg %p305
        %p443 = pneg %p302
        %p444 = pneg %p331
        %p445 = pneg %p328
        %s446 = sand.u32 %s318, 1
        %s447 = scalar_lea.sflag [#allocation3], %s446
        %s448 = sand.u32 %s318, 1
        %s449 = smul.addr %s448, 8
        %s450 = scalar_lea.vmem [#allocation2], %s449
        %s451 = smul.u32 8, %s27
        %p452 = scmp.lt.s32.totalorder %s451, 15
        %s453 = scalar_select %p452, %s451, 15
        %s454 = smul.addr %s453, 8
        %s455 = scalar_lea.vmem %s0, %s454
        %s456 = smul.u32 8, %s27
        %s457 = smul.u32 8, %s27
        %p458 = scmp.lt.s32.totalorder %s457, 15
        %s459 = scalar_select %p458, %s457, 15
        %s460 = smul.addr %s459, 8
        %s461 = scalar_lea.vmem %s1, %s460
        %s462 = smul.u32 8, %s27
        %v464 = vld [vmem:[%s455] sm:$0xff]
        %v465 = vld [vmem:[%s455 + $0x8] sm:$0xff]
        %v466 = vld [vmem:[%s455 + $0x10] sm:$0xff]
        %v467 = vld [vmem:[%s455 + $0x18] sm:$0xff]
        %v468 = vld [vmem:[%s455 + $0x20] sm:$0xff]
        %v469 = vld [vmem:[%s455 + $0x28] sm:$0xff]
        %v470 = vld [vmem:[%s455 + $0x30] sm:$0xff]
        %v471 = vld [vmem:[%s455 + $0x38] sm:$0xff]
        %v472 = vld [vmem:[%s461] sm:$0xff]
        %v473 = vld [vmem:[%s461 + $0x8] sm:$0xff]
        %v474 = vld [vmem:[%s461 + $0x10] sm:$0xff]
        %v475 = vld [vmem:[%s461 + $0x18] sm:$0xff]
        %v476 = vld [vmem:[%s461 + $0x20] sm:$0xff]
        %v477 = vld [vmem:[%s461 + $0x28] sm:$0xff]
        %v478 = vld [vmem:[%s461 + $0x30] sm:$0xff]
        %v479 = vld [vmem:[%s461 + $0x38] sm:$0xff]
        %v480 = vpack.c.bf16 %v473, %v472
        %v481 = vpack.c.bf16 %v475, %v474
        %v482 = vpack.c.bf16 %v477, %v476
        %v483 = vpack.c.bf16 %v479, %v478
        %v484 = vld [vmem:[%s2] sm:$0xf]
        %v485 = vld [vmem:[%s3] sm:$0x1]
        %v487 = vperm.slane %v485, 0
        %vm489 = vcmask 64512
        %v491 = vsel %vm489, %v480, 0
        %v494 = vsel %vm489, %v481, 0
        %v497 = vsel %vm489, %v482, 0
        %v500 = vsel %vm489, %v483, 0
        %vm502 = vcmask 1043456
        %v504 = vsel %vm502, %v484, 0
        %506 = vmatpush.bf16.msra.mxu0 0
        %507 = vmatpush.bf16.msra.mxu0 0
        %508 = vmatpush.bf16.msra.mxu0 0
        %509 = vmatpush.bf16.msra.mxu0 0
        %510 = vmatpush.bf16.msra.mxu0 0
        %511 = vmatpush.bf16.msra.mxu0 0
        %512 = vmatpush.bf16.msra.mxu0 0
        %513 = vmatpush.bf16.msra.mxu0 %v504
        %514 = vmatmul.bf16.gmra.mxu0 %v491
        %v515 = vpop.f32.mrf.mxu0
        %v516 = vadd.f32 %v487, %v515
        %v517 = vpop.f32.mrf.mxu0
        %v518 = vadd.f32 %v487, %v517
        %519 = vmatmul.bf16.gmra.mxu0 %v494
        %v520 = vpop.f32.mrf.mxu0
        %v521 = vadd.f32 %v487, %v520
        %v522 = vpop.f32.mrf.mxu0
        %v523 = vadd.f32 %v487, %v522
        %524 = vmatmul.bf16.gmra.mxu0 %v497
        %v525 = vpop.f32.mrf.mxu0
        %v526 = vadd.f32 %v487, %v525
        %v527 = vpop.f32.mrf.mxu0
        %v528 = vadd.f32 %v487, %v527
        %529 = vmatmul.bf16.gmra.mxu0 %v500
        %v530 = vpop.f32.mrf.mxu0
        %v531 = vadd.f32 %v487, %v530
        %v532 = vpop.f32.mrf.mxu0
        %v533 = vadd.f32 %v487, %v532
        %534 = vdwg.mxu0
        %v535 = vmax.f32 %v516, 0.0
        %v536 = vmax.f32 %v518, 0.0
        %v537 = vmax.f32 %v521, 0.0
        %v538 = vmax.f32 %v523, 0.0
        %v539 = vmax.f32 %v526, 0.0
        %v540 = vmax.f32 %v528, 0.0
        %v541 = vmax.f32 %v531, 0.0
        %v542 = vmax.f32 %v533, 0.0
        %v543 = vpack.c.bf16 %v465, %v464
        %v544 = vpack.c.bf16 %v467, %v466
        %v545 = vpack.c.bf16 %v469, %v468
        %v546 = vpack.c.bf16 %v471, %v470
        %v547 = vld [vmem:[%s4] sm:$0xf]
        %v548 = vld [vmem:[%s4 + $0x4] sm:$0xf]
        %v549 = vpack.c.bf16 %v536, %v535
        %v550 = vpack.c.bf16 %v538, %v537
        %v551 = vpack.c.bf16 %v540, %v539
        %v552 = vpack.c.bf16 %v542, %v541
        %v553 = vld [vmem:[%s5] sm:$0xf]
        %v554 = vld [vmem:[%s5 + $0x4] sm:$0xf]
        %v557 = vunpack.c.l.b16 %v553
        %v558 = vunpack.c.l.b16 %v554
        %v559 = vpack.c.b16 %v558, %v557
        %vm561 = vcmask 130048
        %v563 = vsel %vm561, %v549, 0
        %v566 = vsel %vm561, %v550, 0
        %v569 = vsel %vm561, %v551, 0
        %v572 = vsel %vm561, %v552, 0
        %574 = vmatpush.bf16.msra.mxu0 0
        %575 = vmatpush.bf16.msra.mxu0 0
        %576 = vmatpush.bf16.msra.mxu0 0
        %577 = vmatpush.bf16.msra.mxu0 0
        %578 = vmatpush.bf16.msra.mxu0 0
        %579 = vmatpush.bf16.msra.mxu0 0
        %580 = vmatpush.bf16.msra.mxu0 0
        %581 = vmatpush.bf16.msra.mxu0 %v559
        %582 = vmatmul.bf16.gmra.mxu0 %v563
        %v583 = vpop.f32.mrf.mxu0
        %v584 = vadd.f32 0.0, %v583
        %v585 = vpop.f32.mrf.mxu0
        %v586 = vadd.f32 0.0, %v585
        %587 = vmatmul.bf16.gmra.mxu0 %v566
        %v588 = vpop.f32.mrf.mxu0
        %v589 = vadd.f32 0.0, %v588
        %v590 = vpop.f32.mrf.mxu0
        %v591 = vadd.f32 0.0, %v590
        %592 = vmatmul.bf16.gmra.mxu0 %v569
        %v593 = vpop.f32.mrf.mxu0
        %v594 = vadd.f32 0.0, %v593
        %v595 = vpop.f32.mrf.mxu0
        %v596 = vadd.f32 0.0, %v595
        %597 = vmatmul.bf16.gmra.mxu0 %v572
        %v598 = vpop.f32.mrf.mxu0
        %v599 = vadd.f32 0.0, %v598
        %v600 = vpop.f32.mrf.mxu0
        %v601 = vadd.f32 0.0, %v600
        %602 = vdwg.mxu0
        %v605 = vunpack.c.l.b16 %v547
        %v606 = vunpack.c.l.b16 %v548
        %v607 = vpack.c.b16 %v606, %v605
        %v610 = vsel %vm561, %v543, 0
        %v613 = vsel %vm561, %v544, 0
        %v616 = vsel %vm561, %v545, 0
        %v619 = vsel %vm561, %v546, 0
        %621 = vmatpush.bf16.msra.mxu0 0
        %622 = vmatpush.bf16.msra.mxu0 0
        %623 = vmatpush.bf16.msra.mxu0 0
        %624 = vmatpush.bf16.msra.mxu0 0
        %625 = vmatpush.bf16.msra.mxu0 0
        %626 = vmatpush.bf16.msra.mxu0 0
        %627 = vmatpush.bf16.msra.mxu0 0
        %628 = vmatpush.bf16.msra.mxu0 %v607
        %629 = vmatmul.bf16.gmra.mxu0 %v610
        %v630 = vpop.f32.mrf.mxu0
        %v631 = vadd.f32 %v584, %v630
        %v632 = vpop.f32.mrf.mxu0
        %v633 = vadd.f32 %v586, %v632
        %634 = vmatmul.bf16.gmra.mxu0 %v613
        %v635 = vpop.f32.mrf.mxu0
        %v636 = vadd.f32 %v589, %v635
        %v637 = vpop.f32.mrf.mxu0
        %v638 = vadd.f32 %v591, %v637
        %639 = vmatmul.bf16.gmra.mxu0 %v616
        %v640 = vpop.f32.mrf.mxu0
        %v641 = vadd.f32 %v594, %v640
        %v642 = vpop.f32.mrf.mxu0
        %v643 = vadd.f32 %v596, %v642
        %644 = vmatmul.bf16.gmra.mxu0 %v619
        %v645 = vpop.f32.mrf.mxu0
        %v646 = vadd.f32 %v599, %v645
        %v647 = vpop.f32.mrf.mxu0
        %v648 = vadd.f32 %v601, %v647
        %649 = vdwg.mxu0
        %v650 = vld [vmem:[%s6] sm:$0x1]
        %v652 = vperm.slane %v650, 0
        %v654 = vadd.f32 %v631, %v652
        %v655 = vadd.f32 %v633, %v652
        %v656 = vadd.f32 %v636, %v652
        %v657 = vadd.f32 %v638, %v652
        %v658 = vadd.f32 %v641, %v652
        %v659 = vadd.f32 %v643, %v652
        %v660 = vadd.f32 %v646, %v652
        %v661 = vadd.f32 %v648, %v652
        %v662 = vtanh.pop %v654
        %v663 = vtanh.pop %v655
        %v664 = vtanh.pop %v656
        %v665 = vtanh.pop %v657
        %v666 = vtanh.pop %v658
        %v667 = vtanh.pop %v659
        %v668 = vtanh.pop %v660
        %v669 = vtanh.pop %v661
        %v670 = vld [vmem:[%s7] sm:$0x1]
        %v672 = vperm.slane %v670, 0
        %v674 = vmul.f32 %v672, %v662
        %v675 = vmul.f32 %v672, %v663
        %v676 = vmul.f32 %v672, %v664
        %v677 = vmul.f32 %v672, %v665
        %v678 = vmul.f32 %v672, %v666
        %v679 = vmul.f32 %v672, %v667
        %v680 = vmul.f32 %v672, %v668
        %v681 = vmul.f32 %v672, %v669
        %vm682 = vcmask 261120
        %v683 = vsel %vm682, %v674, 0.0
        %684 = vadd.xlane.f32.xlu0 %v683
        %v685 = vpop.xlane.xlu0 %684
        %v686 = vsel %vm682, %v675, 0.0
        %687 = vadd.xlane.f32.xlu0 %v686
        %v688 = vpop.xlane.xlu0 %687
        %v689 = vsel %vm682, %v676, 0.0
        %690 = vadd.xlane.f32.xlu0 %v689
        %v691 = vpop.xlane.xlu0 %690
        %v692 = vsel %vm682, %v677, 0.0
        %693 = vadd.xlane.f32.xlu0 %v692
        %v694 = vpop.xlane.xlu0 %693
        %v695 = vsel %vm682, %v678, 0.0
        %696 = vadd.xlane.f32.xlu0 %v695
        %v697 = vpop.xlane.xlu0 %696
        %v698 = vsel %vm682, %v679, 0.0
        %699 = vadd.xlane.f32.xlu0 %v698
        %v700 = vpop.xlane.xlu0 %699
        %v701 = vsel %vm682, %v680, 0.0
        %702 = vadd.xlane.f32.xlu0 %v701
        %v703 = vpop.xlane.xlu0 %702
        %v704 = vsel %vm682, %v681, 0.0
        %705 = vadd.xlane.f32.xlu0 %v704
        %v706 = vpop.xlane.xlu0 %705
        %v715 = vlaneseq
        %v716 = vand.u32 %v715, 127
        %v717 = vperm.slane %v685, %v716
        %v718 = vperm.slane %v688, %v716
        %v719 = vperm.slane %v691, %v716
        %v720 = vperm.slane %v694, %v716
        %v721 = vperm.slane %v697, %v716
        %v722 = vperm.slane %v700, %v716
        %v723 = vperm.slane %v703, %v716
        %v724 = vperm.slane %v706, %v716
        %vm725 = vcmask 1041409
        %v726 = vsel %vm725, %v718, %v717
        %vm727 = vcmask 1042434
        %v728 = vsel %vm727, %v719, %v726
        %vm729 = vcmask 1043459
        %v730 = vsel %vm729, %v720, %v728
        %vm731 = vcmask 1044484
        %v732 = vsel %vm731, %v721, %v730
        %vm733 = vcmask 1045509
        %v734 = vsel %vm733, %v722, %v732
        %vm735 = vcmask 1046534
        %v736 = vsel %vm735, %v723, %v734
        %vm737 = vcmask 1047559
        %v738 = vsel %vm737, %v724, %v736
        %v740 = vsel %vm489, %v738, -inf
        %741 = vmax.xlane.f32.xlu0 %v740
        %v742 = vpop.xlane.xlu0 %741
        %v744 = vperm.slane %v742, 0
        %v745 = vperm.slane %v742, 1
        %v746 = vperm.slane %v742, 2
        %v747 = vperm.slane %v742, 3
        %v748 = vperm.slane %v742, 4
        %v749 = vperm.slane %v742, 5
        %v750 = vperm.slane %v742, 6
        %v751 = vperm.slane %v742, 7
        %v760 = vsub.f32 %v685, %v744
        %v761 = vsub.f32 %v688, %v745
        %v762 = vsub.f32 %v691, %v746
        %v763 = vsub.f32 %v694, %v747
        %v764 = vsub.f32 %v697, %v748
        %v765 = vsub.f32 %v700, %v749
        %v766 = vsub.f32 %v703, %v750
        %v767 = vsub.f32 %v706, %v751
        %v768 = vmul.f32 %v760, 1.442695
        %v769 = vpow.pop %v768
        %v770 = vmul.f32 %v761, 1.442695
        %v771 = vpow.pop %v770
        %v772 = vmul.f32 %v762, 1.442695
        %v773 = vpow.pop %v772
        %v774 = vmul.f32 %v763, 1.442695
        %v775 = vpow.pop %v774
        %v776 = vmul.f32 %v764, 1.442695
        %v777 = vpow.pop %v776
        %v778 = vmul.f32 %v765, 1.442695
        %v779 = vpow.pop %v778
        %v780 = vmul.f32 %v766, 1.442695
        %v781 = vpow.pop %v780
        %v782 = vmul.f32 %v767, 1.442695
        %v783 = vpow.pop %v782
        %792 = vset.pattern.permute.xlu0 0
        %793 = vperm.xlu0 %792, %v769
        %v794 = vpop.permute.xlu0 %793
        %795 = vset.pattern.permute.xlu0 0
        %796 = vperm.xlu0 %795, %v771
        %v797 = vpop.permute.xlu0 %796
        %798 = vset.pattern.permute.xlu0 0
        %799 = vperm.xlu0 %798, %v773
        %v800 = vpop.permute.xlu0 %799
        %801 = vset.pattern.permute.xlu0 0
        %802 = vperm.xlu0 %801, %v775
        %v803 = vpop.permute.xlu0 %802
        %804 = vset.pattern.permute.xlu0 0
        %805 = vperm.xlu0 %804, %v777
        %v806 = vpop.permute.xlu0 %805
        %807 = vset.pattern.permute.xlu0 0
        %808 = vperm.xlu0 %807, %v779
        %v809 = vpop.permute.xlu0 %808
        %810 = vset.pattern.permute.xlu0 0
        %811 = vperm.xlu0 %810, %v781
        %v812 = vpop.permute.xlu0 %811
        %813 = vset.pattern.permute.xlu0 0
        %814 = vperm.xlu0 %813, %v783
        %v815 = vpop.permute.xlu0 %814
        %v816 = vperm.slane %v794, %v716
        %v817 = vperm.slane %v797, %v716
        %v818 = vperm.slane %v800, %v716
        %v819 = vperm.slane %v803, %v716
        %v820 = vperm.slane %v806, %v716
        %v821 = vperm.slane %v809, %v716
        %v822 = vperm.slane %v812, %v716
        %v823 = vperm.slane %v815, %v716
        %v824 = vsel %vm725, %v817, %v816
        %v825 = vsel %vm727, %v818, %v824
        %v826 = vsel %vm729, %v819, %v825
        %v827 = vsel %vm731, %v820, %v826
        %v828 = vsel %vm733, %v821, %v827
        %v829 = vsel %vm735, %v822, %v828
        %v830 = vsel %vm737, %v823, %v829
        %v832 = vsel %vm489, %v830, 0.0
        %833 = vadd.xlane.f32.xlu0 %v832
        %v834 = vpop.xlane.xlu0 %833
        %v835 = vrcp.pop %v834
        %v837 = vperm.slane %v835, 0
        %v838 = vperm.slane %v835, 1
        %v839 = vperm.slane %v835, 2
        %v840 = vperm.slane %v835, 3
        %v841 = vperm.slane %v835, 4
        %v842 = vperm.slane %v835, 5
        %v843 = vperm.slane %v835, 6
        %v844 = vperm.slane %v835, 7
        %v853 = vmul.f32 %v769, %v837
        %v854 = vmul.f32 %v771, %v838
        %v855 = vmul.f32 %v773, %v839
        %v856 = vmul.f32 %v775, %v840
        %v857 = vmul.f32 %v777, %v841
        %v858 = vmul.f32 %v779, %v842
        %v859 = vmul.f32 %v781, %v843
        %v860 = vmul.f32 %v783, %v844
        %862 = vset.pattern.permute.xlu0 0
        %863 = vperm.xlu0 %862, %v853
        %v864 = vpop.permute.xlu0 %863
        %867 = vset.pattern.permute.xlu0 0
        %868 = vperm.xlu0 %867, %v854
        %v869 = vpop.permute.xlu0 %868
        %872 = vset.pattern.permute.xlu0 0
        %873 = vperm.xlu0 %872, %v855
        %v874 = vpop.permute.xlu0 %873
        %877 = vset.pattern.permute.xlu0 0
        %878 = vperm.xlu0 %877, %v856
        %v879 = vpop.permute.xlu0 %878
        %882 = vset.pattern.permute.xlu0 0
        %883 = vperm.xlu0 %882, %v857
        %v884 = vpop.permute.xlu0 %883
        %887 = vset.pattern.permute.xlu0 0
        %888 = vperm.xlu0 %887, %v858
        %v889 = vpop.permute.xlu0 %888
        %892 = vset.pattern.permute.xlu0 0
        %893 = vperm.xlu0 %892, %v859
        %v894 = vpop.permute.xlu0 %893
        %897 = vset.pattern.permute.xlu0 0
        %898 = vperm.xlu0 %897, %v860
        %v899 = vpop.permute.xlu0 %898
        %v901 = vmul.f32 %v864, %v464
        %v902 = vmul.f32 %v869, %v465
        %v903 = vmul.f32 %v874, %v466
        %v904 = vmul.f32 %v879, %v467
        %v905 = vmul.f32 %v884, %v468
        %v906 = vmul.f32 %v889, %v469
        %v907 = vmul.f32 %v894, %v470
        %v908 = vmul.f32 %v899, %v471
        %v909 = vsel %vm561, %v901, 0.0
        %v910 = vrot.slane %v909, 4
        %v911 = vadd.f32 %v909, %v910
        %v912 = vrot.slane %v911, 2
        %v913 = vadd.f32 %v911, %v912
        %v914 = vrot.slane %v913, 1
        %v915 = vadd.f32 %v913, %v914
        %v916 = vsel %vm561, %v902, 0.0
        %v917 = vrot.slane %v916, 4
        %v918 = vadd.f32 %v916, %v917
        %v919 = vrot.slane %v918, 2
        %v920 = vadd.f32 %v918, %v919
        %v921 = vrot.slane %v920, 1
        %v922 = vadd.f32 %v920, %v921
        %v923 = vsel %vm561, %v903, 0.0
        %v924 = vrot.slane %v923, 4
        %v925 = vadd.f32 %v923, %v924
        %v926 = vrot.slane %v925, 2
        %v927 = vadd.f32 %v925, %v926
        %v928 = vrot.slane %v927, 1
        %v929 = vadd.f32 %v927, %v928
        %v930 = vsel %vm561, %v904, 0.0
        %v931 = vrot.slane %v930, 4
        %v932 = vadd.f32 %v930, %v931
        %v933 = vrot.slane %v932, 2
        %v934 = vadd.f32 %v932, %v933
        %v935 = vrot.slane %v934, 1
        %v936 = vadd.f32 %v934, %v935
        %v937 = vsel %vm561, %v905, 0.0
        %v938 = vrot.slane %v937, 4
        %v939 = vadd.f32 %v937, %v938
        %v940 = vrot.slane %v939, 2
        %v941 = vadd.f32 %v939, %v940
        %v942 = vrot.slane %v941, 1
        %v943 = vadd.f32 %v941, %v942
        %v944 = vsel %vm561, %v906, 0.0
        %v945 = vrot.slane %v944, 4
        %v946 = vadd.f32 %v944, %v945
        %v947 = vrot.slane %v946, 2
        %v948 = vadd.f32 %v946, %v947
        %v949 = vrot.slane %v948, 1
        %v950 = vadd.f32 %v948, %v949
        %v951 = vsel %vm561, %v907, 0.0
        %v952 = vrot.slane %v951, 4
        %v953 = vadd.f32 %v951, %v952
        %v954 = vrot.slane %v953, 2
        %v955 = vadd.f32 %v953, %v954
        %v956 = vrot.slane %v955, 1
        %v957 = vadd.f32 %v955, %v956
        %v958 = vsel %vm561, %v908, 0.0
        %v959 = vrot.slane %v958, 4
        %v960 = vadd.f32 %v958, %v959
        %v961 = vrot.slane %v960, 2
        %v962 = vadd.f32 %v960, %v961
        %v963 = vrot.slane %v962, 1
        %v964 = vadd.f32 %v962, %v963
        %v965 = vmul.f32 %v864, %v535
        %v966 = vmul.f32 %v869, %v536
        %v967 = vmul.f32 %v874, %v537
        %v968 = vmul.f32 %v879, %v538
        %v969 = vmul.f32 %v884, %v539
        %v970 = vmul.f32 %v889, %v540
        %v971 = vmul.f32 %v894, %v541
        %v972 = vmul.f32 %v899, %v542
        %v973 = vsel %vm561, %v965, 0.0
        %v974 = vrot.slane %v973, 4
        %v975 = vadd.f32 %v973, %v974
        %v976 = vrot.slane %v975, 2
        %v977 = vadd.f32 %v975, %v976
        %v978 = vrot.slane %v977, 1
        %v979 = vadd.f32 %v977, %v978
        %v980 = vsel %vm561, %v966, 0.0
        %v981 = vrot.slane %v980, 4
        %v982 = vadd.f32 %v980, %v981
        %v983 = vrot.slane %v982, 2
        %v984 = vadd.f32 %v982, %v983
        %v985 = vrot.slane %v984, 1
        %v986 = vadd.f32 %v984, %v985
        %v987 = vsel %vm561, %v967, 0.0
        %v988 = vrot.slane %v987, 4
        %v989 = vadd.f32 %v987, %v988
        %v990 = vrot.slane %v989, 2
        %v991 = vadd.f32 %v989, %v990
        %v992 = vrot.slane %v991, 1
        %v993 = vadd.f32 %v991, %v992
        %v994 = vsel %vm561, %v968, 0.0
        %v995 = vrot.slane %v994, 4
        %v996 = vadd.f32 %v994, %v995
        %v997 = vrot.slane %v996, 2
        %v998 = vadd.f32 %v996, %v997
        %v999 = vrot.slane %v998, 1
        %v1000 = vadd.f32 %v998, %v999
        %v1001 = vsel %vm561, %v969, 0.0
        %v1002 = vrot.slane %v1001, 4
        %v1003 = vadd.f32 %v1001, %v1002
        %v1004 = vrot.slane %v1003, 2
        %v1005 = vadd.f32 %v1003, %v1004
        %v1006 = vrot.slane %v1005, 1
        %v1007 = vadd.f32 %v1005, %v1006
        %v1008 = vsel %vm561, %v970, 0.0
        %v1009 = vrot.slane %v1008, 4
        %v1010 = vadd.f32 %v1008, %v1009
        %v1011 = vrot.slane %v1010, 2
        %v1012 = vadd.f32 %v1010, %v1011
        %v1013 = vrot.slane %v1012, 1
        %v1014 = vadd.f32 %v1012, %v1013
        %v1015 = vsel %vm561, %v971, 0.0
        %v1016 = vrot.slane %v1015, 4
        %v1017 = vadd.f32 %v1015, %v1016
        %v1018 = vrot.slane %v1017, 2
        %v1019 = vadd.f32 %v1017, %v1018
        %v1020 = vrot.slane %v1019, 1
        %v1021 = vadd.f32 %v1019, %v1020
        %v1022 = vsel %vm561, %v972, 0.0
        %v1023 = vrot.slane %v1022, 4
        %v1024 = vadd.f32 %v1022, %v1023
        %v1025 = vrot.slane %v1024, 2
        %v1026 = vadd.f32 %v1024, %v1025
        %v1027 = vrot.slane %v1026, 1
        %v1028 = vadd.f32 %v1026, %v1027
        %v1029 = vpack.c.bf16 %v915, %v915
        %v1030 = vpack.c.bf16 %v922, %v922
        %v1031 = vpack.c.bf16 %v929, %v929
        %v1032 = vpack.c.bf16 %v936, %v936
        %v1033 = vpack.c.bf16 %v943, %v943
        %v1034 = vpack.c.bf16 %v950, %v950
        %v1035 = vpack.c.bf16 %v957, %v957
        %v1036 = vpack.c.bf16 %v964, %v964
        %v1037 = vld [vmem:[%s8] sm:$0xf]
        %v1038 = vld [vmem:[%s8 + $0x4] sm:$0xf]
        %v1039 = vpack.c.bf16 %v979, %v979
        %v1040 = vpack.c.bf16 %v986, %v986
        %v1041 = vpack.c.bf16 %v993, %v993
        %v1042 = vpack.c.bf16 %v1000, %v1000
        %v1043 = vpack.c.bf16 %v1007, %v1007
        %v1044 = vpack.c.bf16 %v1014, %v1014
        %v1045 = vpack.c.bf16 %v1021, %v1021
        %v1046 = vpack.c.bf16 %v1028, %v1028
        %v1047 = vld [vmem:[%s9] sm:$0xf]
        %v1048 = vld [vmem:[%s9 + $0x4] sm:$0xf]
        %v1057 = vunpack.c.l.b16 %v1039
        %v1058 = vunpack.c.l.b16 %v1040
        %v1059 = vunpack.c.l.b16 %v1041
        %v1060 = vunpack.c.l.b16 %v1042
        %v1061 = vunpack.c.l.b16 %v1043
        %v1062 = vunpack.c.l.b16 %v1044
        %v1063 = vunpack.c.l.b16 %v1045
        %v1064 = vunpack.c.l.b16 %v1046
        %v1065 = vsel %vm725, %v1058, %v1057
        %v1066 = vsel %vm727, %v1059, %v1065
        %v1067 = vsel %vm729, %v1060, %v1066
        %v1068 = vsel %vm731, %v1061, %v1067
        %v1069 = vsel %vm733, %v1062, %v1068
        %v1070 = vsel %vm735, %v1063, %v1069
        %v1071 = vsel %vm737, %v1064, %v1070
        %v1072 = vpack.c.b16 %v1071, %v1071
        %v1075 = vunpack.c.l.b16 %v1047
        %v1076 = vunpack.c.l.b16 %v1048
        %v1077 = vpack.c.b16 %v1076, %v1075
        %v1080 = vsel %vm561, %v1072, 0
        %1082 = vmatpush.bf16.msra.mxu0 0
        %1083 = vmatpush.bf16.msra.mxu0 0
        %1084 = vmatpush.bf16.msra.mxu0 0
        %1085 = vmatpush.bf16.msra.mxu0 0
        %1086 = vmatpush.bf16.msra.mxu0 0
        %1087 = vmatpush.bf16.msra.mxu0 0
        %1088 = vmatpush.bf16.msra.mxu0 0
        %1089 = vmatpush.bf16.msra.mxu0 %v1077
        %1090 = vmatmul.bf16.gmra.mxu0 %v1080
        %v1091 = vpop.f32.mrf.mxu0
        %v1092 = vadd.f32 0.0, %v1091
        %v1093 = vpop.f32.mrf.mxu0
        %1094 = vdwg.mxu0
        %v1103 = vunpack.c.l.b16 %v1029
        %v1104 = vunpack.c.l.b16 %v1030
        %v1105 = vunpack.c.l.b16 %v1031
        %v1106 = vunpack.c.l.b16 %v1032
        %v1107 = vunpack.c.l.b16 %v1033
        %v1108 = vunpack.c.l.b16 %v1034
        %v1109 = vunpack.c.l.b16 %v1035
        %v1110 = vunpack.c.l.b16 %v1036
        %v1111 = vsel %vm725, %v1104, %v1103
        %v1112 = vsel %vm727, %v1105, %v1111
        %v1113 = vsel %vm729, %v1106, %v1112
        %v1114 = vsel %vm731, %v1107, %v1113
        %v1115 = vsel %vm733, %v1108, %v1114
        %v1116 = vsel %vm735, %v1109, %v1115
        %v1117 = vsel %vm737, %v1110, %v1116
        %v1118 = vpack.c.b16 %v1117, %v1117
        %v1121 = vunpack.c.l.b16 %v1037
        %v1122 = vunpack.c.l.b16 %v1038
        %v1123 = vpack.c.b16 %v1122, %v1121
        %v1126 = vsel %vm561, %v1118, 0
        %1128 = vmatpush.bf16.msra.mxu0 0
        %1129 = vmatpush.bf16.msra.mxu0 0
        %1130 = vmatpush.bf16.msra.mxu0 0
        %1131 = vmatpush.bf16.msra.mxu0 0
        %1132 = vmatpush.bf16.msra.mxu0 0
        %1133 = vmatpush.bf16.msra.mxu0 0
        %1134 = vmatpush.bf16.msra.mxu0 0
        %1135 = vmatpush.bf16.msra.mxu0 %v1123
        %1136 = vmatmul.bf16.gmra.mxu0 %v1126
        %v1137 = vpop.f32.mrf.mxu0
        %v1138 = vadd.f32 %v1092, %v1137
        %v1139 = vpop.f32.mrf.mxu0
        %1140 = vdwg.mxu0
        %v1141 = vld [vmem:[%s10] sm:$0x1]
        %v1143 = vperm.slane %v1141, 0
        %v1145 = vadd.f32 %v1138, %v1143
        %v1146 = vmax.f32 %v1145, 0.0
        %v1147 = vpack.c.bf16 %v1146, %v1146
        %v1148 = vld [vmem:[%s11] sm:$0xf]
        %v1149 = vld [vmem:[%s11 + $0x4] sm:$0xf]
        %v1150 = vld [vmem:[%s11 + $0x8] sm:$0xf]
        %v1151 = vld [vmem:[%s11 + $0xc] sm:$0xf]
        %v1152 = vld [vmem:[%s12] sm:$0x1]
        %v1154 = vperm.slane %v1152, 0
        %v1160 = vunpack.c.l.b16 %v1148
        %v1161 = vunpack.c.l.b16 %v1149
        %v1162 = vunpack.c.l.b16 %v1150
        %v1163 = vunpack.c.l.b16 %v1151
        %v1164 = vpack.c.b16 %v1161, %v1160
        %v1165 = vpack.c.b16 %v1163, %v1162
        %v1169 = vsel %vm682, %v1147, 0
        %1171 = vmatpush.bf16.msra.mxu0 0
        %1172 = vmatpush.bf16.msra.mxu0 0
        %1173 = vmatpush.bf16.msra.mxu0 0
        %1174 = vmatpush.bf16.msra.mxu0 0
        %1175 = vmatpush.bf16.msra.mxu0 0
        %1176 = vmatpush.bf16.msra.mxu0 0
        %1177 = vmatpush.bf16.msra.mxu0 %v1165
        %1178 = vmatpush.bf16.msra.mxu0 %v1164
        %1179 = vmatmul.bf16.gmra.mxu0 %v1169
        %v1180 = vpop.f32.mrf.mxu0
        %v1181 = vadd.f32 %v1154, %v1180
        %v1182 = vpop.f32.mrf.mxu0
        %1183 = vdwg.mxu0
        %1184 = vst [vmem:[%s450] sm:$0xff] %v1181
        %s1185 = sand.u32 %s318, 1
        %s1186 = scalar_lea.sflag [#allocation3], %s1185
        %s1187 = sand.u32 %s318, 1
        %s1188 = smul.addr %s1187, 8
        %s1189 = scalar_lea.vmem [#allocation2], %s1188
        // Predicated region
        $region73: #{tpu_custom_call.1} parent=71 // pred_check
          %p1190 = pneg %p328
        $region74: #{tpu_custom_call.1} parent=71 // pred_check_branch
          %1192 = sbr.rel (%p1190) target = $region76
        $region75: #{tpu_custom_call.1} parent=71 // pred_region
          %1194 = vsyncadd %s1186, 0
          %s1195 = smul.addr %s27, 8
          %s1196 = scalar_lea.hbm %s13, %s1195
          %s1198 = sshll.u32 %s1189, 4
          %s1199 = int_to_ptr.vmem [resolvable:$true] %s1198
          %s1200 = sshll.u32 %s1196, 4
          %s1201 = int_to_ptr.hbm [resolvable:$true] %s1200
          %1203 = dma.vmem_to_hbm [thread:$0]  %s1199, 128, %s1201, %s1186
        $region76: #{tpu_custom_call.1} parent=71 // pred_fallthru
          _
      $region72: #{tpu_custom_call.1} parent=5 // pred_fallthru
        _
      %p1204 = scmp.le.s32.totalorder 2, %s22
      // Predicated region
      $region77: #{tpu_custom_call.1} parent=5 // pred_check
        %p1205 = pneg %p1204
      $region78: #{tpu_custom_call.1} parent=5 // pred_check_branch
        %1207 = sbr.rel (%p1205) target = $region80
      $region79: #{tpu_custom_call.1} parent=5 // pred_region
        %s1208 = ssub.s32 %s22, 2
        // Predicated region
        $region81: #{tpu_custom_call.1} parent=79 // pred_check
          %p1209 = pneg %p334
        $region82: #{tpu_custom_call.1} parent=79 // pred_check_branch
          %1211 = sbr.rel (%p1209) target = $region84
        $region83: #{tpu_custom_call.1} parent=79 // pred_region
          %s1212 = sand.u32 %s319, 1
          %s1213 = scalar_lea.sflag [#allocation3], %s1212
          %s1214 = sand.u32 %s319, 1
          %s1215 = smul.addr %s1214, 8
          %s1216 = scalar_lea.vmem [#allocation2], %s1215
          %1218 = dma.done %s1213, 128
        $region84: #{tpu_custom_call.1} parent=79 // pred_fallthru
          _
      $region80: #{tpu_custom_call.1} parent=5 // pred_fallthru
        _
    $region6: #{tpu_custom_call.1} parent=1 // loop_footer
      %s26 = sadd.s32 1, %s22
    $region7: #{tpu_custom_call.1} parent=1 // loop_footer_branch
      %21 = sbr.rel target = $region3
    $region8: #{tpu_custom_call.1} parent=1 // loop_exit
      _
    %1219 = vsyncpa [#allocation3], 1
    %s1220 = scalar_lea.sflag [#allocation3], 1
    %1221 = vsyncpa %s1220, 1

</llo_original>
